<compile_context>
chip_gen: v5e
topology: v5e:2x2
jax: 0.10.0
libtpu: 0.0.40
codegen_flags: <defaults>
</compile_context>

<pallas_src>
import functools

import jax
import jax.numpy as jnp
from jax import lax
from jax.experimental import pallas as pl
from jax.experimental.pallas import tpu as pltpu


def _fused_mhca_kernel(x1_ref, x2_ref, mask_ref, wq_ref, wkv_ref, *rest,
                       n_head, d_head, has_tail):
    """Fused per-batch cross-attention: QKV projection + all heads + concat + tail."""
    if has_tail:
        wt_ref, bt_ref, o_ref = rest
    else:
        (o_ref,) = rest

    x1 = x1_ref[0]                 # (T, D_model)
    x2 = x2_ref[0]                 # (T, D_model)
    m = mask_ref[0]                # (1, T) float32; 0.0 means masked key position

    # Full-width projections (MXU N dim = d_cat / 2*d_cat instead of d_head).
    # Softmax scale is folded into wq on the host.
    q_all = jnp.dot(x1, wq_ref[...], preferred_element_type=jnp.float32)     # (T, H*dh)
    kv_all = jnp.dot(x2, wkv_ref[...], preferred_element_type=jnp.float32)   # (T, 2*H*dh)

    neg_big = jnp.float32(-1e30)
    head_outs = []
    for h in range(n_head):        # static unroll over heads (tiny T x T matmuls)
        q_h = q_all[:, h * d_head:(h + 1) * d_head]                          # (T, dh)
        base = 2 * h * d_head      # matches torch view(b,t,h,2*dh).chunk(2, dim=-1)
        k_h = kv_all[:, base:base + d_head]                                  # (T, dh)
        v_h = kv_all[:, base + d_head:base + 2 * d_head]                     # (T, dh)

        # dots = q_h @ k_h^T  (contract on d_head; no in-kernel transpose)
        s = lax.dot_general(q_h, k_h, (((1,), (1,)), ((), ())),
                            preferred_element_type=jnp.float32)              # (T, T)
        s = jnp.where(m == 0.0, neg_big, s)          # finite fill: no NaN rows
        s = s - jnp.max(s, axis=-1, keepdims=True)
        p = jnp.exp(s)
        denom = jnp.sum(p, axis=-1, keepdims=True)
        p = p * pl.reciprocal(denom, approx=True)    # EUP reciprocal, keeps VALU free
        # TODO(synk): nn.Dropout on attention coefficients skipped (inference mode).
        head_outs.append(jnp.dot(p, v_h, preferred_element_type=jnp.float32))

    att = jnp.concatenate(head_outs, axis=-1)        # (T, H*dh), lane-dense

    if has_tail:
        # tail[0]: Linear(d_cat, d_model); tail[1] Dropout skipped (inference).
        y = jnp.dot(att, wt_ref[...], preferred_element_type=jnp.float32) + bt_ref[...]
    else:
        y = att                                      # tail is nn.Identity()
    o_ref[0] = y.astype(o_ref.dtype)


def multi_head_cross_attention(x1, x2, params, *, n_head, d_head, mask=None):
    """Forward pass of MultiHeadCrossAttention (inference / eval mode)."""
    B, T, D = x1.shape
    d_cat = n_head * d_head
    scale = float(d_head) ** -0.5
    has_tail = not (n_head == 1 and d_cat == D)

    # Host-side (trace-time) layout plumbing: transpose weights to (K, N) and fold
    # the softmax scale into the Q projection.
    wq_t = (params["w_q"].T * scale).astype(x1.dtype)        # (D, d_cat)
    wkv_t = params["w_kv"].T.astype(x1.dtype)                # (D, 2*d_cat)

    # Mask kept in f32 independent of activation dtype (robust 0/1 comparison).
    if mask is None:
        mask3 = jnp.ones((B, 1, T), dtype=jnp.float32)
    else:
        mask3 = (mask.reshape(B, 1, T) != 0).astype(jnp.float32)

    in_arrays = [x1, x2, mask3, wq_t, wkv_t]
    in_specs = [
        pl.BlockSpec((1, T, D), lambda b: (b, 0, 0)),          # x1
        pl.BlockSpec((1, T, D), lambda b: (b, 0, 0)),          # x2
        pl.BlockSpec((1, 1, T), lambda b: (b, 0, 0)),          # mask
        pl.BlockSpec((D, d_cat), lambda b: (0, 0)),            # Wq^T (scale folded)
        pl.BlockSpec((D, 2 * d_cat), lambda b: (0, 0)),        # Wkv^T
    ]

    d_out = D if has_tail else d_cat
    if has_tail:
        wt_t = params["w_tail"].T.astype(x1.dtype)             # (d_cat, D)
        b_tail = params["b_tail"].reshape(1, D).astype(jnp.float32)
        in_arrays += [wt_t, b_tail]
        in_specs += [
            pl.BlockSpec((d_cat, D), lambda b: (0, 0)),        # Wtail^T
            pl.BlockSpec((1, D), lambda b: (0, 0)),            # b_tail
        ]

    kernel = functools.partial(_fused_mhca_kernel, n_head=n_head,
                               d_head=d_head, has_tail=has_tail)
    out = pl.pallas_call(
        kernel,
        out_shape=jax.ShapeDtypeStruct((B, T, d_out), x1.dtype),
        grid=(B,),
        in_specs=in_specs,
        out_specs=pl.BlockSpec((1, T, d_out), lambda b: (b, 0, 0)),
        compiler_params=pltpu.CompilerParams(
            dimension_semantics=("parallel",)),                # batch across TCs (v7x)
    )(*in_arrays)
    return out


def _reference(x1, x2, params, n_head, d_head, mask=None):
    """Pure-JAX replica of the PyTorch forward (eval mode) for verification."""
    D = x1.shape[-1]
    d_cat = n_head * d_head
    q = x1 @ params["w_q"].T
    kv = x2 @ params["w_kv"].T
    b, t, _ = q.shape
    q = q.reshape(b, t, n_head, d_head).transpose(0, 2, 1, 3)
    kv = kv.reshape(b, t, n_head, 2 * d_head)
    k = kv[..., :d_head].transpose(0, 2, 1, 3)
    v = kv[..., d_head:].transpose(0, 2, 1, 3)
    dots = jnp.einsum("bhtd,bhsd->bhts", q, k) * (float(d_head) ** -0.5)
    if mask is not None:
        dots = jnp.where(mask.reshape(b, 1, 1, t) == 0.0, -jnp.inf, dots)
    coef = jax.nn.softmax(dots, axis=-1)
    att = jnp.einsum("bhts,bhsd->bhtd", coef, v)
    out = att.transpose(0, 2, 1, 3).reshape(b, t, d_cat)
    if not (n_head == 1 and d_cat == D):
        out = out @ params["w_tail"].T + params["b_tail"]
    return out


if __name__ == "__main__":
    # Module config: d_model=32, d_head=16, n_head=4, drop_p=0.1 (dropout off in eval)
    B, T, D = 2, 8, 32
    n_head, d_head = 4, 16
    d_cat = n_head * d_head

    key = jax.random.PRNGKey(0)
    k1, k2, k3, k4, k5, k6 = jax.random.split(key, 6)
    x1 = jax.random.normal(k1, (B, T, D), jnp.float32)
    x2 = jax.random.normal(k2, (B, T, D), jnp.float32)
    params = {
        "w_q": jax.random.normal(k3, (d_cat, D), jnp.float32) * 0.05,       # to_q.weight
        "w_kv": jax.random.normal(k4, (2 * d_cat, D), jnp.float32) * 0.05,  # to_kv.weight
        "w_tail": jax.random.normal(k5, (D, d_cat), jnp.float32) * 0.05,    # tail[0].weight
        "b_tail": jax.random.normal(k6, (D,), jnp.float32) * 0.05,          # tail[0].bias
    }

    # --- no mask ---
    out = multi_head_cross_attention(x1, x2, params, n_head=n_head, d_head=d_head)
    out = jax.block_until_ready(out)
    ref = _reference(x1, x2, params, n_head, d_head)
    assert out.shape == (B, T, D)
    assert bool(jnp.allclose(out, ref, rtol=2e-2, atol=2e-2)), "mismatch (no mask)"

    # --- with a mask (no fully-masked rows) ---
    mask = jnp.ones((B, T), jnp.float32).at[:, -2:].set(0.0)
    out_m = multi_head_cross_attention(x1, x2, params, n_head=n_head,
                                       d_head=d_head, mask=mask)
    out_m = jax.block_until_ready(out_m)
    ref_m = _reference(x1, x2, params, n_head, d_head, mask=mask)
    assert bool(jnp.allclose(out_m, ref_m, rtol=2e-2, atol=2e-2)), "mismatch (masked)"

    print("KERNEL_OK")
</pallas_src>

<mosaic_0001>
module attributes {stable_mosaic.version = 11 : i64} {
  func.func @_fused_mhca_kernel(%arg0: i32, %arg1: memref<1x8x32xf32, #tpu.memory_space<vmem>>, %arg2: memref<1x8x32xf32, #tpu.memory_space<vmem>>, %arg3: memref<1x1x8xf32, #tpu.memory_space<vmem>>, %arg4: memref<32x64xf32, #tpu.memory_space<vmem>>, %arg5: memref<32x128xf32, #tpu.memory_space<vmem>>, %arg6: memref<64x32xf32, #tpu.memory_space<vmem>>, %arg7: memref<1x32xf32, #tpu.memory_space<vmem>>, %arg8: memref<1x8x32xf32, #tpu.memory_space<vmem>>) attributes {dimension_semantics = [#tpu.dimension_semantics<parallel>], iteration_bounds = array<i64: 2>, scalar_prefetch = 0 : i64, scratch_operands = 0 : i64, tpu.core_type = #tpu.core_type<tc>, window_params = [{transform_indices = @transform_0, window_bounds = array<i64: 1, 8, 32>}, {transform_indices = @transform_1, window_bounds = array<i64: 1, 8, 32>}, {transform_indices = @transform_2, window_bounds = array<i64: 1, 1, 8>}, {pipeline_mode = #tpu.pipeline_mode<synchronous>, transform_indices = @transform_3, window_bounds = array<i64: 32, 64>}, {pipeline_mode = #tpu.pipeline_mode<synchronous>, transform_indices = @transform_4, window_bounds = array<i64: 32, 128>}, {pipeline_mode = #tpu.pipeline_mode<synchronous>, transform_indices = @transform_5, window_bounds = array<i64: 64, 32>}, {pipeline_mode = #tpu.pipeline_mode<synchronous>, transform_indices = @transform_6, window_bounds = array<i64: 1, 32>}, {transform_indices = @transform_7, window_bounds = array<i64: 1, 8, 32>}]} {
    %c0 = arith.constant 0 : index
    %c0_0 = arith.constant 0 : index
    %c0_1 = arith.constant 0 : index
    %0 = vector.load %arg1[%c0, %c0_0, %c0_1] : memref<1x8x32xf32, #tpu.memory_space<vmem>>, vector<1x8x32xf32>
    %1 = vector.shape_cast %0 : vector<1x8x32xf32> to vector<8x32xf32>
    %c0_2 = arith.constant 0 : index
    %c0_3 = arith.constant 0 : index
    %c0_4 = arith.constant 0 : index
    %2 = vector.load %arg2[%c0_2, %c0_3, %c0_4] : memref<1x8x32xf32, #tpu.memory_space<vmem>>, vector<1x8x32xf32>
    %3 = vector.shape_cast %2 : vector<1x8x32xf32> to vector<8x32xf32>
    %c0_5 = arith.constant 0 : index
    %c0_6 = arith.constant 0 : index
    %c0_7 = arith.constant 0 : index
    %4 = vector.load %arg3[%c0_5, %c0_6, %c0_7] : memref<1x1x8xf32, #tpu.memory_space<vmem>>, vector<1x1x8xf32>
    %5 = vector.shape_cast %4 : vector<1x1x8xf32> to vector<1x8xf32>
    %c0_8 = arith.constant 0 : index
    %c0_9 = arith.constant 0 : index
    %6 = vector.load %arg4[%c0_8, %c0_9] : memref<32x64xf32, #tpu.memory_space<vmem>>, vector<32x64xf32>
    %cst = arith.constant dense<0.000000e+00> : vector<8x64xf32>
    %7 = tpu.matmul %1, %6, %cst {dimension_numbers = #tpu.dot_dimension_numbers<[1], [0], [0], [1], [0, 0, 1, 1], [], []>} : vector<8x32xf32>, vector<32x64xf32>, vector<8x64xf32> -> vector<8x64xf32>
    %c0_10 = arith.constant 0 : index
    %c0_11 = arith.constant 0 : index
    %8 = vector.load %arg5[%c0_10, %c0_11] : memref<32x128xf32, #tpu.memory_space<vmem>>, vector<32x128xf32>
    %cst_12 = arith.constant dense<0.000000e+00> : vector<8x128xf32>
    %9 = tpu.matmul %3, %8, %cst_12 {dimension_numbers = #tpu.dot_dimension_numbers<[1], [0], [0], [1], [0, 0, 1, 1], [], []>} : vector<8x32xf32>, vector<32x128xf32>, vector<8x128xf32> -> vector<8x128xf32>
    %10 = vector.extract_strided_slice %7 {offsets = [0, 0], sizes = [8, 16], strides = [1, 1]} : vector<8x64xf32> to vector<8x16xf32>
    %11 = vector.extract_strided_slice %9 {offsets = [0, 0], sizes = [8, 16], strides = [1, 1]} : vector<8x128xf32> to vector<8x16xf32>
    %12 = vector.extract_strided_slice %9 {offsets = [0, 16], sizes = [8, 16], strides = [1, 1]} : vector<8x128xf32> to vector<8x16xf32>
    %cst_13 = arith.constant dense<0.000000e+00> : vector<8x8xf32>
    %13 = tpu.matmul %10, %11, %cst_13 {dimension_numbers = #tpu.dot_dimension_numbers<[1], [1], [0], [0], [0, 0, 1, 0], [], []>} : vector<8x16xf32>, vector<8x16xf32>, vector<8x8xf32> -> vector<8x8xf32>
    %cst_14 = arith.constant 0.000000e+00 : f32
    %14 = vector.broadcast %cst_14 : f32 to vector<1x8xf32>
    %15 = arith.cmpf oeq, %5, %14 : vector<1x8xf32>
    %cst_15 = arith.constant -1.000000e+30 : f32
    %16 = vector.shape_cast %15 : vector<1x8xi1> to vector<1x8xi1>
    %17 = vector.broadcast %16 : vector<1x8xi1> to vector<8x8xi1>
    %18 = vector.broadcast %cst_15 : f32 to vector<8x8xf32>
    %19 = arith.select %17, %18, %13 : vector<8x8xi1>, vector<8x8xf32>
    %cst_16 = arith.constant dense<0xFF800000> : vector<8xf32>
    %20 = vector.multi_reduction <maximumf>, %19, %cst_16 [1] : vector<8x8xf32> to vector<8xf32>
    %21 = vector.shape_cast %20 : vector<8xf32> to vector<8x1xf32>
    %22 = vector.broadcast %21 : vector<8x1xf32> to vector<8x8xf32>
    %23 = arith.subf %19, %22 : vector<8x8xf32>
    %24 = math.exp %23 : vector<8x8xf32>
    %cst_17 = arith.constant dense<0.000000e+00> : vector<8xf32>
    %25 = vector.multi_reduction <add>, %24, %cst_17 [1] : vector<8x8xf32> to vector<8xf32>
    %26 = vector.shape_cast %25 : vector<8xf32> to vector<8x1xf32>
    %27 = tpu.reciprocal %26 {approx = true} : vector<8x1xf32> -> vector<8x1xf32>
    %28 = vector.broadcast %27 : vector<8x1xf32> to vector<8x8xf32>
    %29 = arith.mulf %24, %28 : vector<8x8xf32>
    %cst_18 = arith.constant dense<0.000000e+00> : vector<8x16xf32>
    %30 = tpu.matmul %29, %12, %cst_18 {dimension_numbers = #tpu.dot_dimension_numbers<[1], [0], [0], [1], [0, 0, 1, 1], [], []>} : vector<8x8xf32>, vector<8x16xf32>, vector<8x16xf32> -> vector<8x16xf32>
    %31 = vector.extract_strided_slice %7 {offsets = [0, 16], sizes = [8, 16], strides = [1, 1]} : vector<8x64xf32> to vector<8x16xf32>
    %32 = vector.extract_strided_slice %9 {offsets = [0, 32], sizes = [8, 16], strides = [1, 1]} : vector<8x128xf32> to vector<8x16xf32>
    %33 = vector.extract_strided_slice %9 {offsets = [0, 48], sizes = [8, 16], strides = [1, 1]} : vector<8x128xf32> to vector<8x16xf32>
    %cst_19 = arith.constant dense<0.000000e+00> : vector<8x8xf32>
    %34 = tpu.matmul %31, %32, %cst_19 {dimension_numbers = #tpu.dot_dimension_numbers<[1], [1], [0], [0], [0, 0, 1, 0], [], []>} : vector<8x16xf32>, vector<8x16xf32>, vector<8x8xf32> -> vector<8x8xf32>
    %cst_20 = arith.constant 0.000000e+00 : f32
    %35 = vector.broadcast %cst_20 : f32 to vector<1x8xf32>
    %36 = arith.cmpf oeq, %5, %35 : vector<1x8xf32>
    %cst_21 = arith.constant -1.000000e+30 : f32
    %37 = vector.shape_cast %36 : vector<1x8xi1> to vector<1x8xi1>
    %38 = vector.broadcast %37 : vector<1x8xi1> to vector<8x8xi1>
    %39 = vector.broadcast %cst_21 : f32 to vector<8x8xf32>
    %40 = arith.select %38, %39, %34 : vector<8x8xi1>, vector<8x8xf32>
    %cst_22 = arith.constant dense<0xFF800000> : vector<8xf32>
    %41 = vector.multi_reduction <maximumf>, %40, %cst_22 [1] : vector<8x8xf32> to vector<8xf32>
    %42 = vector.shape_cast %41 : vector<8xf32> to vector<8x1xf32>
    %43 = vector.broadcast %42 : vector<8x1xf32> to vector<8x8xf32>
    %44 = arith.subf %40, %43 : vector<8x8xf32>
    %45 = math.exp %44 : vector<8x8xf32>
    %cst_23 = arith.constant dense<0.000000e+00> : vector<8xf32>
    %46 = vector.multi_reduction <add>, %45, %cst_23 [1] : vector<8x8xf32> to vector<8xf32>
    %47 = vector.shape_cast %46 : vector<8xf32> to vector<8x1xf32>
    %48 = tpu.reciprocal %47 {approx = true} : vector<8x1xf32> -> vector<8x1xf32>
    %49 = vector.broadcast %48 : vector<8x1xf32> to vector<8x8xf32>
    %50 = arith.mulf %45, %49 : vector<8x8xf32>
    %cst_24 = arith.constant dense<0.000000e+00> : vector<8x16xf32>
    %51 = tpu.matmul %50, %33, %cst_24 {dimension_numbers = #tpu.dot_dimension_numbers<[1], [0], [0], [1], [0, 0, 1, 1], [], []>} : vector<8x8xf32>, vector<8x16xf32>, vector<8x16xf32> -> vector<8x16xf32>
    %52 = vector.extract_strided_slice %7 {offsets = [0, 32], sizes = [8, 16], strides = [1, 1]} : vector<8x64xf32> to vector<8x16xf32>
    %53 = vector.extract_strided_slice %9 {offsets = [0, 64], sizes = [8, 16], strides = [1, 1]} : vector<8x128xf32> to vector<8x16xf32>
    %54 = vector.extract_strided_slice %9 {offsets = [0, 80], sizes = [8, 16], strides = [1, 1]} : vector<8x128xf32> to vector<8x16xf32>
    %cst_25 = arith.constant dense<0.000000e+00> : vector<8x8xf32>
    %55 = tpu.matmul %52, %53, %cst_25 {dimension_numbers = #tpu.dot_dimension_numbers<[1], [1], [0], [0], [0, 0, 1, 0], [], []>} : vector<8x16xf32>, vector<8x16xf32>, vector<8x8xf32> -> vector<8x8xf32>
    %cst_26 = arith.constant 0.000000e+00 : f32
    %56 = vector.broadcast %cst_26 : f32 to vector<1x8xf32>
    %57 = arith.cmpf oeq, %5, %56 : vector<1x8xf32>
    %cst_27 = arith.constant -1.000000e+30 : f32
    %58 = vector.shape_cast %57 : vector<1x8xi1> to vector<1x8xi1>
    %59 = vector.broadcast %58 : vector<1x8xi1> to vector<8x8xi1>
    %60 = vector.broadcast %cst_27 : f32 to vector<8x8xf32>
    %61 = arith.select %59, %60, %55 : vector<8x8xi1>, vector<8x8xf32>
    %cst_28 = arith.constant dense<0xFF800000> : vector<8xf32>
    %62 = vector.multi_reduction <maximumf>, %61, %cst_28 [1] : vector<8x8xf32> to vector<8xf32>
    %63 = vector.shape_cast %62 : vector<8xf32> to vector<8x1xf32>
    %64 = vector.broadcast %63 : vector<8x1xf32> to vector<8x8xf32>
    %65 = arith.subf %61, %64 : vector<8x8xf32>
    %66 = math.exp %65 : vector<8x8xf32>
    %cst_29 = arith.constant dense<0.000000e+00> : vector<8xf32>
    %67 = vector.multi_reduction <add>, %66, %cst_29 [1] : vector<8x8xf32> to vector<8xf32>
    %68 = vector.shape_cast %67 : vector<8xf32> to vector<8x1xf32>
    %69 = tpu.reciprocal %68 {approx = true} : vector<8x1xf32> -> vector<8x1xf32>
    %70 = vector.broadcast %69 : vector<8x1xf32> to vector<8x8xf32>
    %71 = arith.mulf %66, %70 : vector<8x8xf32>
    %cst_30 = arith.constant dense<0.000000e+00> : vector<8x16xf32>
    %72 = tpu.matmul %71, %54, %cst_30 {dimension_numbers = #tpu.dot_dimension_numbers<[1], [0], [0], [1], [0, 0, 1, 1], [], []>} : vector<8x8xf32>, vector<8x16xf32>, vector<8x16xf32> -> vector<8x16xf32>
    %73 = vector.extract_strided_slice %7 {offsets = [0, 48], sizes = [8, 16], strides = [1, 1]} : vector<8x64xf32> to vector<8x16xf32>
    %74 = vector.extract_strided_slice %9 {offsets = [0, 96], sizes = [8, 16], strides = [1, 1]} : vector<8x128xf32> to vector<8x16xf32>
    %75 = vector.extract_strided_slice %9 {offsets = [0, 112], sizes = [8, 16], strides = [1, 1]} : vector<8x128xf32> to vector<8x16xf32>
    %cst_31 = arith.constant dense<0.000000e+00> : vector<8x8xf32>
    %76 = tpu.matmul %73, %74, %cst_31 {dimension_numbers = #tpu.dot_dimension_numbers<[1], [1], [0], [0], [0, 0, 1, 0], [], []>} : vector<8x16xf32>, vector<8x16xf32>, vector<8x8xf32> -> vector<8x8xf32>
    %cst_32 = arith.constant 0.000000e+00 : f32
    %77 = vector.broadcast %cst_32 : f32 to vector<1x8xf32>
    %78 = arith.cmpf oeq, %5, %77 : vector<1x8xf32>
    %cst_33 = arith.constant -1.000000e+30 : f32
    %79 = vector.shape_cast %78 : vector<1x8xi1> to vector<1x8xi1>
    %80 = vector.broadcast %79 : vector<1x8xi1> to vector<8x8xi1>
    %81 = vector.broadcast %cst_33 : f32 to vector<8x8xf32>
    %82 = arith.select %80, %81, %76 : vector<8x8xi1>, vector<8x8xf32>
    %cst_34 = arith.constant dense<0xFF800000> : vector<8xf32>
    %83 = vector.multi_reduction <maximumf>, %82, %cst_34 [1] : vector<8x8xf32> to vector<8xf32>
    %84 = vector.shape_cast %83 : vector<8xf32> to vector<8x1xf32>
    %85 = vector.broadcast %84 : vector<8x1xf32> to vector<8x8xf32>
    %86 = arith.subf %82, %85 : vector<8x8xf32>
    %87 = math.exp %86 : vector<8x8xf32>
    %cst_35 = arith.constant dense<0.000000e+00> : vector<8xf32>
    %88 = vector.multi_reduction <add>, %87, %cst_35 [1] : vector<8x8xf32> to vector<8xf32>
    %89 = vector.shape_cast %88 : vector<8xf32> to vector<8x1xf32>
    %90 = tpu.reciprocal %89 {approx = true} : vector<8x1xf32> -> vector<8x1xf32>
    %91 = vector.broadcast %90 : vector<8x1xf32> to vector<8x8xf32>
    %92 = arith.mulf %87, %91 : vector<8x8xf32>
    %cst_36 = arith.constant dense<0.000000e+00> : vector<8x16xf32>
    %93 = tpu.matmul %92, %75, %cst_36 {dimension_numbers = #tpu.dot_dimension_numbers<[1], [0], [0], [1], [0, 0, 1, 1], [], []>} : vector<8x8xf32>, vector<8x16xf32>, vector<8x16xf32> -> vector<8x16xf32>
    %94 = tpu.concatenate %30, %51, %72, %93 in 1 : vector<8x16xf32>, vector<8x16xf32>, vector<8x16xf32>, vector<8x16xf32> -> vector<8x64xf32>
    %c0_37 = arith.constant 0 : index
    %c0_38 = arith.constant 0 : index
    %95 = vector.load %arg6[%c0_37, %c0_38] : memref<64x32xf32, #tpu.memory_space<vmem>>, vector<64x32xf32>
    %cst_39 = arith.constant dense<0.000000e+00> : vector<8x32xf32>
    %96 = tpu.matmul %94, %95, %cst_39 {dimension_numbers = #tpu.dot_dimension_numbers<[1], [0], [0], [1], [0, 0, 1, 1], [], []>} : vector<8x64xf32>, vector<64x32xf32>, vector<8x32xf32> -> vector<8x32xf32>
    %c0_40 = arith.constant 0 : index
    %c0_41 = arith.constant 0 : index
    %97 = vector.load %arg7[%c0_40, %c0_41] : memref<1x32xf32, #tpu.memory_space<vmem>>, vector<1x32xf32>
    %98 = vector.broadcast %97 : vector<1x32xf32> to vector<8x32xf32>
    %99 = arith.addf %96, %98 : vector<8x32xf32>
    %c0_42 = arith.constant 0 : index
    %c0_43 = arith.constant 0 : index
    %c0_44 = arith.constant 0 : index
    %100 = vector.load %arg8[%c0_42, %c0_43, %c0_44] : memref<1x8x32xf32, #tpu.memory_space<vmem>>, vector<1x8x32xf32>
    %101 = vector.shape_cast %100 : vector<1x8x32xf32> to vector<8x32xf32>
    %102 = vector.shape_cast %99 : vector<8x32xf32> to vector<1x8x32xf32>
    tpu.vector_store %arg8[%c0_42, %c0_43, %c0_44], %102 {strides = array<i32>} : memref<1x8x32xf32, #tpu.memory_space<vmem>>, vector<1x8x32xf32>,
    return
  }
  func.func @transform_0(%arg0: i32) -> (i32, i32, i32) {
    %c0_i32 = arith.constant 0 : i32
    %c0_i32_0 = arith.constant 0 : i32
    %c0_i32_1 = arith.constant 0 : i32
    return %arg0, %c0_i32, %c0_i32_0 : i32, i32, i32
  }
  func.func @transform_1(%arg0: i32) -> (i32, i32, i32) {
    %c0_i32 = arith.constant 0 : i32
    %c0_i32_0 = arith.constant 0 : i32
    %c0_i32_1 = arith.constant 0 : i32
    return %arg0, %c0_i32, %c0_i32_0 : i32, i32, i32
  }
  func.func @transform_2(%arg0: i32) -> (i32, i32, i32) {
    %c0_i32 = arith.constant 0 : i32
    %c0_i32_0 = arith.constant 0 : i32
    %c0_i32_1 = arith.constant 0 : i32
    return %arg0, %c0_i32, %c0_i32_0 : i32, i32, i32
  }
  func.func @transform_3(%arg0: i32) -> (i32, i32) {
    %c0_i32 = arith.constant 0 : i32
    %c0_i32_0 = arith.constant 0 : i32
    %c0_i32_1 = arith.constant 0 : i32
    return %c0_i32, %c0_i32_0 : i32, i32
  }
  func.func @transform_4(%arg0: i32) -> (i32, i32) {
    %c0_i32 = arith.constant 0 : i32
    %c0_i32_0 = arith.constant 0 : i32
    %c0_i32_1 = arith.constant 0 : i32
    return %c0_i32, %c0_i32_0 : i32, i32
  }
  func.func @transform_5(%arg0: i32) -> (i32, i32) {
    %c0_i32 = arith.constant 0 : i32
    %c0_i32_0 = arith.constant 0 : i32
    %c0_i32_1 = arith.constant 0 : i32
    return %c0_i32, %c0_i32_0 : i32, i32
  }
  func.func @transform_6(%arg0: i32) -> (i32, i32) {
    %c0_i32 = arith.constant 0 : i32
    %c0_i32_0 = arith.constant 0 : i32
    %c0_i32_1 = arith.constant 0 : i32
    return %c0_i32, %c0_i32_0 : i32, i32
  }
  func.func @transform_7(%arg0: i32) -> (i32, i32, i32) {
    %c0_i32 = arith.constant 0 : i32
    %c0_i32_0 = arith.constant 0 : i32
    %c0_i32_1 = arith.constant 0 : i32
    return %arg0, %c0_i32, %c0_i32_0 : i32, i32, i32
  }
}

</mosaic_0001>

<llo_original>
// kernel: tpu_custom_call.1
$region0: #{tpu_custom_call.1}
  #allocation0 [shape = 'u32[]', space=smem, size = 0x4, offset = 0x4, fixed_abs, tag = 'smem constant byte address 0x4 - core index']
  #allocation1 [shape = 'u32[72,128]{1,0:T(1,128)}', space=vmem, size = 0x9000, scoped, tag = 'internal scratch']
  %s0 = inlined_call_operand.vmem [shape: f32[2,8,32], index: 0, kind: input, shape index: {}]
  %s1 = inlined_call_operand.vmem [shape: f32[2,8,32], index: 1, kind: input, shape index: {}]
  %s2 = inlined_call_operand.hbm [shape: f32[2,1,8], index: 2, kind: input, shape index: {}]
  %s3 = inlined_call_operand.vmem [shape: f32[32,64], index: 3, kind: input, shape index: {}]
  %s4 = inlined_call_operand.vmem [shape: f32[32,128], index: 4, kind: input, shape index: {}]
  %s5 = inlined_call_operand.vmem [shape: f32[64,32], index: 5, kind: input, shape index: {}]
  %s6 = inlined_call_operand.vmem [shape: f32[1,32], index: 6, kind: input, shape index: {}]
  %s7 = inlined_call_operand.hbm [shape: f32[2,8,32], index: 7, kind: output, shape index: {}]
  %s8 = sld [smem:[#allocation0]]
  $region65: #{tpu_custom_call.1} parent=0
    _
  %s10 = ssub.s32 1, %s8
  %s11 = scalar_select 0, %s10, %s8
  $region1: #{tpu_custom_call.1} parent=0
    #allocation2 [shape = 'u8[1024]{0}', space=vmem, size = 0x400, scoped, tag = 'input window, operand 2']
    #allocation3 [shape = 's32[2]{0}', space=sflag, size = 0x8, scoped, tag = 'scoped memory for tpu_custom_call.1']
    #allocation4 [shape = 's32[2]{0}', space=sflag, size = 0x8, scoped, tag = 'scoped memory for tpu_custom_call.1']
    #allocation5 [shape = 'u8[8192]{0}', space=vmem, size = 0x2000, scoped, tag = 'output window, operand 0']
    %12 = vsyncpa [#allocation3], 0
    %s13 = scalar_lea.sflag [#allocation3], 1
    %14 = vsyncpa %s13, 0
    %15 = vsyncpa [#allocation4], 0
    %s16 = scalar_lea.sflag [#allocation4], 1
    %17 = vsyncpa %s16, 0
    loop: start=0, step=1, limit=4
    $region2: #{tpu_custom_call.1} parent=1 // loop_pre_header
      _
    $region3: #{tpu_custom_call.1} parent=1 // loop_header
      %s19 = sphi 0, %s23
      %p20 = scmp.ge.s32.totalorder %s19, 4
      %s29 = sphi 0, %s31
      %s32 = sphi 0, %s29
      %s33 = sphi 0, %s32
      %s49 = sphi 0, %s33
      %s55 = sphi 0, %s57
      %s58 = sphi 0, %s55
      %s59 = sphi 0, %s58
      %s75 = sphi 0, %s59
      %s81 = sphi 0, %s83
      %s84 = sphi 0, %s81
      %s85 = sphi 0, %s84
      %s101 = sphi 0, %s85
      %s105 = sphi 0, %s105
      %s107 = sphi 0, %s105
      %s108 = sphi 0, %s107
      %s122 = sphi 0, %s108
      %s126 = sphi 0, %s126
      %s128 = sphi 0, %s126
      %s129 = sphi 0, %s128
      %s143 = sphi 0, %s129
      %s147 = sphi 0, %s147
      %s149 = sphi 0, %s147
      %s150 = sphi 0, %s149
      %s164 = sphi 0, %s150
      %s168 = sphi 0, %s168
      %s170 = sphi 0, %s168
      %s171 = sphi 0, %s170
      %s185 = sphi 0, %s171
      %s191 = sphi 0, %s193
      %s194 = sphi 0, %s191
      %s195 = sphi 0, %s194
      %s211 = sphi 0, %s195
    $region4: #{tpu_custom_call.1} parent=1 // loop_header_branch
      %22 = sbr.rel (%p20) target = $region8
    $region5: #{tpu_custom_call.1} parent=1 // loop_body
      %s24 = ssub.s32 %s19, 1
      %s25 = ssub.s32 %s19, 2
      %s26 = sadd.s32 %s19, 1
      %s27 = ssub.s32 %s19, %s26
      %p28 = scmp.eq.s32.totalorder %s27, 0
      %s30 = sadd.s32 %s29, 1
      %s31 = scalar_select %p28, %s29, %s30
      %p34 = pneg %p28
      %p35 = scmp.eq.s32.totalorder %s19, 1
      %p36 = por %p34, %p35
      %p37 = scmp.ne.s32.totalorder %s29, %s32
      %p38 = scmp.eq.s32.totalorder %s19, 0
      %p39 = por %p37, %p38
      %p40 = scmp.ne.s32.totalorder %s29, %s32
      %p41 = scmp.eq.s32.totalorder %s24, 1
      %p42 = por %p40, %p41
      %p43 = scmp.ne.s32.totalorder %s32, %s33
      %p44 = scmp.eq.s32.totalorder %s24, 0
      %p45 = por %p43, %p44
      %p46 = scmp.ne.s32.totalorder %s32, %s33
      %p47 = scmp.eq.s32.totalorder %s25, 1
      %p48 = por %p46, %p47
      %p50 = scmp.ne.s32.totalorder %s33, %s49
      %p51 = scmp.eq.s32.totalorder %s25, 0
      %p52 = por %p50, %p51
      %s53 = ssub.s32 %s19, %s26
      %p54 = scmp.eq.s32.totalorder %s53, 0
      %s56 = sadd.s32 %s55, 1
      %s57 = scalar_select %p54, %s55, %s56
      %p60 = pneg %p54
      %p61 = scmp.eq.s32.totalorder %s19, 1
      %p62 = por %p60, %p61
      %p63 = scmp.ne.s32.totalorder %s55, %s58
      %p64 = scmp.eq.s32.totalorder %s19, 0
      %p65 = por %p63, %p64
      %p66 = scmp.ne.s32.totalorder %s55, %s58
      %p67 = scmp.eq.s32.totalorder %s24, 1
      %p68 = por %p66, %p67
      %p69 = scmp.ne.s32.totalorder %s58, %s59
      %p70 = scmp.eq.s32.totalorder %s24, 0
      %p71 = por %p69, %p70
      %p72 = scmp.ne.s32.totalorder %s58, %s59
      %p73 = scmp.eq.s32.totalorder %s25, 1
      %p74 = por %p72, %p73
      %p76 = scmp.ne.s32.totalorder %s59, %s75
      %p77 = scmp.eq.s32.totalorder %s25, 0
      %p78 = por %p76, %p77
      %s79 = ssub.s32 %s19, %s26
      %p80 = scmp.eq.s32.totalorder %s79, 0
      %s82 = sadd.s32 %s81, 1
      %s83 = scalar_select %p80, %s81, %s82
      %p86 = pneg %p80
      %p87 = scmp.eq.s32.totalorder %s19, 1
      %p88 = por %p86, %p87
      %p89 = scmp.ne.s32.totalorder %s81, %s84
      %p90 = scmp.eq.s32.totalorder %s19, 0
      %p91 = por %p89, %p90
      %p92 = scmp.ne.s32.totalorder %s81, %s84
      %p93 = scmp.eq.s32.totalorder %s24, 1
      %p94 = por %p92, %p93
      %p95 = scmp.ne.s32.totalorder %s84, %s85
      %p96 = scmp.eq.s32.totalorder %s24, 0
      %p97 = por %p95, %p96
      %p98 = scmp.ne.s32.totalorder %s84, %s85
      %p99 = scmp.eq.s32.totalorder %s25, 1
      %p100 = por %p98, %p99
      %p102 = scmp.ne.s32.totalorder %s85, %s101
      %p103 = scmp.eq.s32.totalorder %s25, 0
      %p104 = por %p102, %p103
      %s106 = sadd.s32 %s105, 1
      %p109 = scmp.eq.s32.totalorder %s19, 1
      %p110 = scmp.ne.s32.totalorder %s105, %s107
      %p111 = scmp.eq.s32.totalorder %s19, 0
      %p112 = por %p110, %p111
      %p113 = scmp.ne.s32.totalorder %s105, %s107
      %p114 = scmp.eq.s32.totalorder %s24, 1
      %p115 = por %p113, %p114
      %p116 = scmp.ne.s32.totalorder %s107, %s108
      %p117 = scmp.eq.s32.totalorder %s24, 0
      %p118 = por %p116, %p117
      %p119 = scmp.ne.s32.totalorder %s107, %s108
      %p120 = scmp.eq.s32.totalorder %s25, 1
      %p121 = por %p119, %p120
      %p123 = scmp.ne.s32.totalorder %s108, %s122
      %p124 = scmp.eq.s32.totalorder %s25, 0
      %p125 = por %p123, %p124
      %s127 = sadd.s32 %s126, 1
      %p130 = scmp.eq.s32.totalorder %s19, 1
      %p131 = scmp.ne.s32.totalorder %s126, %s128
      %p132 = scmp.eq.s32.totalorder %s19, 0
      %p133 = por %p131, %p132
      %p134 = scmp.ne.s32.totalorder %s126, %s128
      %p135 = scmp.eq.s32.totalorder %s24, 1
      %p136 = por %p134, %p135
      %p137 = scmp.ne.s32.totalorder %s128, %s129
      %p138 = scmp.eq.s32.totalorder %s24, 0
      %p139 = por %p137, %p138
      %p140 = scmp.ne.s32.totalorder %s128, %s129
      %p141 = scmp.eq.s32.totalorder %s25, 1
      %p142 = por %p140, %p141
      %p144 = scmp.ne.s32.totalorder %s129, %s143
      %p145 = scmp.eq.s32.totalorder %s25, 0
      %p146 = por %p144, %p145
      %s148 = sadd.s32 %s147, 1
      %p151 = scmp.eq.s32.totalorder %s19, 1
      %p152 = scmp.ne.s32.totalorder %s147, %s149
      %p153 = scmp.eq.s32.totalorder %s19, 0
      %p154 = por %p152, %p153
      %p155 = scmp.ne.s32.totalorder %s147, %s149
      %p156 = scmp.eq.s32.totalorder %s24, 1
      %p157 = por %p155, %p156
      %p158 = scmp.ne.s32.totalorder %s149, %s150
      %p159 = scmp.eq.s32.totalorder %s24, 0
      %p160 = por %p158, %p159
      %p161 = scmp.ne.s32.totalorder %s149, %s150
      %p162 = scmp.eq.s32.totalorder %s25, 1
      %p163 = por %p161, %p162
      %p165 = scmp.ne.s32.totalorder %s150, %s164
      %p166 = scmp.eq.s32.totalorder %s25, 0
      %p167 = por %p165, %p166
      %s169 = sadd.s32 %s168, 1
      %p172 = scmp.eq.s32.totalorder %s19, 1
      %p173 = scmp.ne.s32.totalorder %s168, %s170
      %p174 = scmp.eq.s32.totalorder %s19, 0
      %p175 = por %p173, %p174
      %p176 = scmp.ne.s32.totalorder %s168, %s170
      %p177 = scmp.eq.s32.totalorder %s24, 1
      %p178 = por %p176, %p177
      %p179 = scmp.ne.s32.totalorder %s170, %s171
      %p180 = scmp.eq.s32.totalorder %s24, 0
      %p181 = por %p179, %p180
      %p182 = scmp.ne.s32.totalorder %s170, %s171
      %p183 = scmp.eq.s32.totalorder %s25, 1
      %p184 = por %p182, %p183
      %p186 = scmp.ne.s32.totalorder %s171, %s185
      %p187 = scmp.eq.s32.totalorder %s25, 0
      %p188 = por %p186, %p187
      %s189 = ssub.s32 %s19, %s26
      %p190 = scmp.eq.s32.totalorder %s189, 0
      %s192 = sadd.s32 %s191, 1
      %s193 = scalar_select %p190, %s191, %s192
      %p196 = pneg %p190
      %p197 = scmp.eq.s32.totalorder %s19, 1
      %p198 = por %p196, %p197
      %p199 = scmp.ne.s32.totalorder %s191, %s194
      %p200 = scmp.eq.s32.totalorder %s19, 0
      %p201 = por %p199, %p200
      %p202 = scmp.ne.s32.totalorder %s191, %s194
      %p203 = scmp.eq.s32.totalorder %s24, 1
      %p204 = por %p202, %p203
      %p205 = scmp.ne.s32.totalorder %s194, %s195
      %p206 = scmp.eq.s32.totalorder %s24, 0
      %p207 = por %p205, %p206
      %p208 = scmp.ne.s32.totalorder %s194, %s195
      %p209 = scmp.eq.s32.totalorder %s25, 1
      %p210 = por %p208, %p209
      %p212 = scmp.ne.s32.totalorder %s195, %s211
      %p213 = scmp.eq.s32.totalorder %s25, 0
      %p214 = por %p212, %p213
      %p215 = scmp.le.s32.totalorder 1, %s19
      %p216 = scmp.lt.s32.totalorder %s19, 3
      %p217 = pnand %p215, %p216
      %p218 = pneg %p217
      // Predicated region
      $region9: #{tpu_custom_call.1} parent=5 // pred_check
        _
      $region10: #{tpu_custom_call.1} parent=5 // pred_check_branch
        %220 = sbr.rel (%p217) target = $region12
      $region11: #{tpu_custom_call.1} parent=5 // pred_region
        %s221 = ssub.s32 %s19, 1
        // Predicated region
        $region13: #{tpu_custom_call.1} parent=11 // pred_check
          %p222 = pneg %p118
        $region14: #{tpu_custom_call.1} parent=11 // pred_check_branch
          %224 = sbr.rel (%p222) target = $region16
        $region15: #{tpu_custom_call.1} parent=11 // pred_region
          _
        $region16: #{tpu_custom_call.1} parent=11 // pred_fallthru
          _
        // Predicated region
        $region17: #{tpu_custom_call.1} parent=11 // pred_check
          %p225 = pneg %p139
        $region18: #{tpu_custom_call.1} parent=11 // pred_check_branch
          %227 = sbr.rel (%p225) target = $region20
        $region19: #{tpu_custom_call.1} parent=11 // pred_region
          _
        $region20: #{tpu_custom_call.1} parent=11 // pred_fallthru
          _
        // Predicated region
        $region21: #{tpu_custom_call.1} parent=11 // pred_check
          %p228 = pneg %p160
        $region22: #{tpu_custom_call.1} parent=11 // pred_check_branch
          %230 = sbr.rel (%p228) target = $region24
        $region23: #{tpu_custom_call.1} parent=11 // pred_region
          _
        $region24: #{tpu_custom_call.1} parent=11 // pred_fallthru
          _
        // Predicated region
        $region25: #{tpu_custom_call.1} parent=11 // pred_check
          %p231 = pneg %p181
        $region26: #{tpu_custom_call.1} parent=11 // pred_check_branch
          %233 = sbr.rel (%p231) target = $region28
        $region27: #{tpu_custom_call.1} parent=11 // pred_region
          _
        $region28: #{tpu_custom_call.1} parent=11 // pred_fallthru
          _
      $region12: #{tpu_custom_call.1} parent=5 // pred_fallthru
        _
      %p234 = scmp.lt.s32.totalorder %s19, 2
      // Predicated region
      $region29: #{tpu_custom_call.1} parent=5 // pred_check
        %p235 = pneg %p234
      $region30: #{tpu_custom_call.1} parent=5 // pred_check_branch
        %237 = sbr.rel (%p235) target = $region32
      $region31: #{tpu_custom_call.1} parent=5 // pred_region
        // Predicated region
        $region33: #{tpu_custom_call.1} parent=31 // pred_check
          %p238 = pneg %p39
        $region34: #{tpu_custom_call.1} parent=31 // pred_check_branch
          %240 = sbr.rel (%p238) target = $region36
        $region35: #{tpu_custom_call.1} parent=31 // pred_region
          %p241 = scmp.lt.s32.totalorder %s19, 1
          %s242 = scalar_select %p241, %s19, 1
          %s243 = smul.addr %s242, 8
          %s244 = scalar_lea.vmem %s0, %s243
        $region36: #{tpu_custom_call.1} parent=31 // pred_fallthru
          _
        // Predicated region
        $region37: #{tpu_custom_call.1} parent=31 // pred_check
          %p245 = pneg %p65
        $region38: #{tpu_custom_call.1} parent=31 // pred_check_branch
          %247 = sbr.rel (%p245) target = $region40
        $region39: #{tpu_custom_call.1} parent=31 // pred_region
          %p248 = scmp.lt.s32.totalorder %s19, 1
          %s249 = scalar_select %p248, %s19, 1
          %s250 = smul.addr %s249, 8
          %s251 = scalar_lea.vmem %s1, %s250
        $region40: #{tpu_custom_call.1} parent=31 // pred_fallthru
          _
        // Predicated region
        $region41: #{tpu_custom_call.1} parent=31 // pred_check
          %p252 = pneg %p91
        $region42: #{tpu_custom_call.1} parent=31 // pred_check_branch
          %254 = sbr.rel (%p252) target = $region44
        $region43: #{tpu_custom_call.1} parent=31 // pred_region
          %s255 = sand.u32 %s81, 1
          %s256 = scalar_lea.sflag [#allocation3], %s255
          %s257 = sand.u32 %s81, 1
          %s258 = scalar_lea.vmem [#allocation2], %s257
          %260 = vsyncadd %s256, 0
          %s261 = scalar_lea.hbm %s2, %s19
          %s263 = sshll.u32 %s261, 4
          %s264 = int_to_ptr.hbm [resolvable:$true] %s263
          %s265 = sshll.u32 %s258, 4
          %s266 = int_to_ptr.vmem [resolvable:$true] %s265
          %268 = dma.hbm_to_vmem [thread:$0]  %s264, 16, %s266, %s256
        $region44: #{tpu_custom_call.1} parent=31 // pred_fallthru
          _
      $region32: #{tpu_custom_call.1} parent=5 // pred_fallthru
        _
      %p269 = scmp.le.s32.totalorder 1, %s19
      %p270 = scmp.lt.s32.totalorder %s19, 3
      %p271 = pnand %p269, %p270
      %p272 = pneg %p271
      // Predicated region
      $region45: #{tpu_custom_call.1} parent=5 // pred_check
        _
      $region46: #{tpu_custom_call.1} parent=5 // pred_check_branch
        %274 = sbr.rel (%p271) target = $region48
      $region47: #{tpu_custom_call.1} parent=5 // pred_region
        %s275 = ssub.s32 %s19, 1
        %s276 = sand.u32 %s84, 1
        %s277 = scalar_lea.sflag [#allocation3], %s276
        %s278 = sand.u32 %s84, 1
        %s279 = scalar_lea.vmem [#allocation2], %s278
        // Predicated region
        $region49: #{tpu_custom_call.1} parent=47 // pred_check
          %p280 = pneg %p97
        $region50: #{tpu_custom_call.1} parent=47 // pred_check_branch
          %282 = sbr.rel (%p280) target = $region52
        $region51: #{tpu_custom_call.1} parent=47 // pred_region
          %284 = dma.done %s277, 16
        $region52: #{tpu_custom_call.1} parent=47 // pred_fallthru
          _
        %p285 = scmp.lt.s32.totalorder %s24, 1
        %s286 = scalar_select %p285, %s24, 1
        %s287 = smul.addr %s286, 8
        %s288 = scalar_lea.vmem %s0, %s287
        %p289 = pneg %p45
        %p290 = pneg %p42
        %p291 = scmp.lt.s32.totalorder %s24, 1
        %s292 = scalar_select %p291, %s24, 1
        %s293 = smul.addr %s292, 8
        %s294 = scalar_lea.vmem %s1, %s293
        %p295 = pneg %p71
        %p296 = pneg %p68
        %s297 = sand.u32 %s84, 1
        %s298 = scalar_lea.sflag [#allocation3], %s297
        %s299 = sand.u32 %s84, 1
        %s300 = scalar_lea.vmem [#allocation2], %s299
        %p301 = pneg %p97
        %p302 = pneg %p94
        %p303 = pneg %p118
        %p304 = pneg %p115
        %p305 = pneg %p139
        %p306 = pneg %p136
        %p307 = pneg %p160
        %p308 = pneg %p157
        %p309 = pneg %p181
        %p310 = pneg %p178
        %p311 = pneg %p207
        %p312 = pneg %p204
        %s313 = sand.u32 %s194, 1
        %s314 = scalar_lea.sflag [#allocation4], %s313
        %s315 = sand.u32 %s194, 1
        %s316 = smul.addr %s315, 8
        %s317 = scalar_lea.vmem [#allocation5], %s316
        %p318 = scmp.lt.s32.totalorder %s24, 1
        %s319 = scalar_select %p318, %s24, 1
        %s320 = smul.addr %s319, 8
        %s321 = scalar_lea.vmem %s0, %s320
        %p322 = scmp.lt.s32.totalorder %s24, 1
        %s323 = scalar_select %p322, %s24, 1
        %s324 = smul.addr %s323, 8
        %s325 = scalar_lea.vmem %s1, %s324
        %v326 = vld [vmem:[%s321] sm:$0xff]
        %v327 = vld [vmem:[%s325] sm:$0xff]
        %v328 = vld [vmem:[%s279] sm:$0x1]
        %v329 = vld [vmem:[%s3] sm:$0xff]
        %v330 = vld [vmem:[%s3 + $0x8] sm:$0xff]
        %v331 = vld [vmem:[%s3 + $0x10] sm:$0xff]
        %v332 = vld [vmem:[%s3 + $0x18] sm:$0xff]
        %vm333 = vcmask 261120
        %v335 = vsel %vm333, %v326, 0
        %337 = vmatpush.msra.mxu0 0.0
        %338 = vmatpush.msra.mxu0 0.0
        %339 = vmatpush.msra.mxu0 0.0
        %340 = vmatpush.msra.mxu0 0.0
        %341 = vmatpush.msra.mxu0 0.0
        %342 = vmatpush.msra.mxu0 0.0
        %343 = vmatpush.msra.mxu0 0.0
        %344 = vmatpush.msra.mxu0 0.0
        %345 = vmatpush.msra.mxu0 0.0
        %346 = vmatpush.msra.mxu0 0.0
        %347 = vmatpush.msra.mxu0 0.0
        %348 = vmatpush.msra.mxu0 0.0
        %349 = vmatpush.msra.mxu0 %v332
        %350 = vmatpush.msra.mxu0 %v331
        %351 = vmatpush.msra.mxu0 %v330
        %352 = vmatpush.msra.mxu0 %v329
        %353 = vmatmul.f32.gmra.mxu0 %v335
        %v354 = vpop.f32.mrf.mxu0
        %v355 = vadd.f32 0.0, %v354
        %356 = vdwg.mxu0
        %v357 = vld [vmem:[%s4] sm:$0xff]
        %v358 = vld [vmem:[%s4 + $0x8] sm:$0xff]
        %v359 = vld [vmem:[%s4 + $0x10] sm:$0xff]
        %v360 = vld [vmem:[%s4 + $0x18] sm:$0xff]
        %v362 = vsel %vm333, %v327, 0
        %364 = vmatpush.msra.mxu0 0.0
        %365 = vmatpush.msra.mxu0 0.0
        %366 = vmatpush.msra.mxu0 0.0
        %367 = vmatpush.msra.mxu0 0.0
        %368 = vmatpush.msra.mxu0 0.0
        %369 = vmatpush.msra.mxu0 0.0
        %370 = vmatpush.msra.mxu0 0.0
        %371 = vmatpush.msra.mxu0 0.0
        %372 = vmatpush.msra.mxu0 0.0
        %373 = vmatpush.msra.mxu0 0.0
        %374 = vmatpush.msra.mxu0 0.0
        %375 = vmatpush.msra.mxu0 0.0
        %376 = vmatpush.msra.mxu0 %v360
        %377 = vmatpush.msra.mxu0 %v359
        %378 = vmatpush.msra.mxu0 %v358
        %379 = vmatpush.msra.mxu0 %v357
        %380 = vmatmul.f32.gmra.mxu0 %v362
        %v381 = vpop.f32.mrf.mxu0
        %v382 = vadd.f32 0.0, %v381
        %383 = vdwg.mxu0
        %vm384 = vcmask 130048
        %v386 = vsel %vm384, %v355, 0
        %v389 = vsel %vm384, %v382, 0
        %391 = vmatpush.xpose.msra.mxu0 0.0
        %392 = vmatpush.xpose.msra.mxu0 0.0
        %393 = vmatpush.xpose.msra.mxu0 0.0
        %394 = vmatpush.xpose.msra.mxu0 0.0
        %395 = vmatpush.xpose.msra.mxu0 0.0
        %396 = vmatpush.xpose.msra.mxu0 0.0
        %397 = vmatpush.xpose.msra.mxu0 0.0
        %398 = vmatpush.xpose.msra.mxu0 0.0
        %399 = vmatpush.xpose.msra.mxu0 0.0
        %400 = vmatpush.xpose.msra.mxu0 0.0
        %401 = vmatpush.xpose.msra.mxu0 0.0
        %402 = vmatpush.xpose.msra.mxu0 0.0
        %403 = vmatpush.xpose.msra.mxu0 0.0
        %404 = vmatpush.xpose.msra.mxu0 0.0
        %405 = vmatpush.xpose.msra.mxu0 0.0
        %406 = vmatpush.xpose.msra.mxu0 %v389
        %407 = vmatmul.f32.gmra.mxu0 %v386
        %v408 = vpop.f32.mrf.mxu0
        %v409 = vadd.f32 0.0, %v408
        %410 = vdwg.mxu0
        %vm411 = vcmp.eq.f32.partialorder %v328, 0.0
        %v412 = vsel %vm411, 1, 0
        %v413 = vperm.slane %v412, 0
        %vm414 = vcmp.eq.s32.totalorder %v413, 1
        %v415 = vsel %vm414, -1e+30, %v409
        %vm416 = vcmask 64512
        %v417 = vsel %vm416, %v415, -inf
        %418 = vmax.xlane.f32.xlu0 %v417
        %v419 = vpop.xlane.xlu0 %418
        %v420 = vsub.f32 %v415, %v419
        %v421 = vmul.f32 %v420, 1.442695
        %v422 = vpow.pop %v421
        %v423 = vsel %vm416, %v422, 0.0
        %424 = vadd.xlane.f32.xlu0 %v423
        %v425 = vpop.xlane.xlu0 %424
        %v426 = vrcp.pop %v425
        %v427 = vmul.f32 %v422, %v426
        %428 = vrot.lane.b32.xlu0 %v382, 112
        %v429 = vpop.permute.xlu0 %428
        %v432 = vsel %vm416, %v427, 0
        %434 = vmatpush.msra.mxu0 0.0
        %435 = vmatpush.msra.mxu0 0.0
        %436 = vmatpush.msra.mxu0 0.0
        %437 = vmatpush.msra.mxu0 0.0
        %438 = vmatpush.msra.mxu0 0.0
        %439 = vmatpush.msra.mxu0 0.0
        %440 = vmatpush.msra.mxu0 0.0
        %441 = vmatpush.msra.mxu0 0.0
        %442 = vmatpush.msra.mxu0 0.0
        %443 = vmatpush.msra.mxu0 0.0
        %444 = vmatpush.msra.mxu0 0.0
        %445 = vmatpush.msra.mxu0 0.0
        %446 = vmatpush.msra.mxu0 0.0
        %447 = vmatpush.msra.mxu0 0.0
        %448 = vmatpush.msra.mxu0 0.0
        %449 = vmatpush.msra.mxu0 %v429
        %450 = vmatmul.f32.gmra.mxu0 %v432
        %v451 = vpop.f32.mrf.mxu0
        %v452 = vadd.f32 0.0, %v451
        %453 = vdwg.mxu0
        %454 = vrot.lane.b32.xlu0 %v355, 112
        %v455 = vpop.permute.xlu0 %454
        %456 = vrot.lane.b32.xlu0 %v382, 96
        %v457 = vpop.permute.xlu0 %456
        %v458 = vsel %vm384, %v455, 0
        %v460 = vsel %vm384, %v457, 0
        %462 = vmatpush.xpose.msra.mxu0 0.0
        %463 = vmatpush.xpose.msra.mxu0 0.0
        %464 = vmatpush.xpose.msra.mxu0 0.0
        %465 = vmatpush.xpose.msra.mxu0 0.0
        %466 = vmatpush.xpose.msra.mxu0 0.0
        %467 = vmatpush.xpose.msra.mxu0 0.0
        %468 = vmatpush.xpose.msra.mxu0 0.0
        %469 = vmatpush.xpose.msra.mxu0 0.0
        %470 = vmatpush.xpose.msra.mxu0 0.0
        %471 = vmatpush.xpose.msra.mxu0 0.0
        %472 = vmatpush.xpose.msra.mxu0 0.0
        %473 = vmatpush.xpose.msra.mxu0 0.0
        %474 = vmatpush.xpose.msra.mxu0 0.0
        %475 = vmatpush.xpose.msra.mxu0 0.0
        %476 = vmatpush.xpose.msra.mxu0 0.0
        %477 = vmatpush.xpose.msra.mxu0 %v460
        %478 = vmatmul.f32.gmra.mxu0 %v458
        %v479 = vpop.f32.mrf.mxu0
        %v480 = vadd.f32 0.0, %v479
        %481 = vdwg.mxu0
        %v482 = vsel %vm414, -1e+30, %v480
        %v483 = vsel %vm416, %v482, -inf
        %484 = vmax.xlane.f32.xlu0 %v483
        %v485 = vpop.xlane.xlu0 %484
        %v486 = vsub.f32 %v482, %v485
        %v487 = vmul.f32 %v486, 1.442695
        %v488 = vpow.pop %v487
        %v489 = vsel %vm416, %v488, 0.0
        %490 = vadd.xlane.f32.xlu0 %v489
        %v491 = vpop.xlane.xlu0 %490
        %v492 = vrcp.pop %v491
        %v493 = vmul.f32 %v488, %v492
        %494 = vrot.lane.b32.xlu0 %v382, 80
        %v495 = vpop.permute.xlu0 %494
        %v498 = vsel %vm416, %v493, 0
        %500 = vmatpush.msra.mxu0 0.0
        %501 = vmatpush.msra.mxu0 0.0
        %502 = vmatpush.msra.mxu0 0.0
        %503 = vmatpush.msra.mxu0 0.0
        %504 = vmatpush.msra.mxu0 0.0
        %505 = vmatpush.msra.mxu0 0.0
        %506 = vmatpush.msra.mxu0 0.0
        %507 = vmatpush.msra.mxu0 0.0
        %508 = vmatpush.msra.mxu0 0.0
        %509 = vmatpush.msra.mxu0 0.0
        %510 = vmatpush.msra.mxu0 0.0
        %511 = vmatpush.msra.mxu0 0.0
        %512 = vmatpush.msra.mxu0 0.0
        %513 = vmatpush.msra.mxu0 0.0
        %514 = vmatpush.msra.mxu0 0.0
        %515 = vmatpush.msra.mxu0 %v495
        %516 = vmatmul.f32.gmra.mxu0 %v498
        %v517 = vpop.f32.mrf.mxu0
        %v518 = vadd.f32 0.0, %v517
        %519 = vdwg.mxu0
        %520 = vrot.lane.b32.xlu0 %v355, 96
        %v521 = vpop.permute.xlu0 %520
        %522 = vrot.lane.b32.xlu0 %v382, 64
        %v523 = vpop.permute.xlu0 %522
        %v524 = vsel %vm384, %v521, 0
        %v526 = vsel %vm384, %v523, 0
        %528 = vmatpush.xpose.msra.mxu0 0.0
        %529 = vmatpush.xpose.msra.mxu0 0.0
        %530 = vmatpush.xpose.msra.mxu0 0.0
        %531 = vmatpush.xpose.msra.mxu0 0.0
        %532 = vmatpush.xpose.msra.mxu0 0.0
        %533 = vmatpush.xpose.msra.mxu0 0.0
        %534 = vmatpush.xpose.msra.mxu0 0.0
        %535 = vmatpush.xpose.msra.mxu0 0.0
        %536 = vmatpush.xpose.msra.mxu0 0.0
        %537 = vmatpush.xpose.msra.mxu0 0.0
        %538 = vmatpush.xpose.msra.mxu0 0.0
        %539 = vmatpush.xpose.msra.mxu0 0.0
        %540 = vmatpush.xpose.msra.mxu0 0.0
        %541 = vmatpush.xpose.msra.mxu0 0.0
        %542 = vmatpush.xpose.msra.mxu0 0.0
        %543 = vmatpush.xpose.msra.mxu0 %v526
        %544 = vmatmul.f32.gmra.mxu0 %v524
        %v545 = vpop.f32.mrf.mxu0
        %v546 = vadd.f32 0.0, %v545
        %547 = vdwg.mxu0
        %v548 = vsel %vm414, -1e+30, %v546
        %v549 = vsel %vm416, %v548, -inf
        %550 = vmax.xlane.f32.xlu0 %v549
        %v551 = vpop.xlane.xlu0 %550
        %v552 = vsub.f32 %v548, %v551
        %v553 = vmul.f32 %v552, 1.442695
        %v554 = vpow.pop %v553
        %v555 = vsel %vm416, %v554, 0.0
        %556 = vadd.xlane.f32.xlu0 %v555
        %v557 = vpop.xlane.xlu0 %556
        %v558 = vrcp.pop %v557
        %v559 = vmul.f32 %v554, %v558
        %560 = vrot.lane.b32.xlu0 %v382, 48
        %v561 = vpop.permute.xlu0 %560
        %v564 = vsel %vm416, %v559, 0
        %566 = vmatpush.msra.mxu0 0.0
        %567 = vmatpush.msra.mxu0 0.0
        %568 = vmatpush.msra.mxu0 0.0
        %569 = vmatpush.msra.mxu0 0.0
        %570 = vmatpush.msra.mxu0 0.0
        %571 = vmatpush.msra.mxu0 0.0
        %572 = vmatpush.msra.mxu0 0.0
        %573 = vmatpush.msra.mxu0 0.0
        %574 = vmatpush.msra.mxu0 0.0
        %575 = vmatpush.msra.mxu0 0.0
        %576 = vmatpush.msra.mxu0 0.0
        %577 = vmatpush.msra.mxu0 0.0
        %578 = vmatpush.msra.mxu0 0.0
        %579 = vmatpush.msra.mxu0 0.0
        %580 = vmatpush.msra.mxu0 0.0
        %581 = vmatpush.msra.mxu0 %v561
        %582 = vmatmul.f32.gmra.mxu0 %v564
        %v583 = vpop.f32.mrf.mxu0
        %v584 = vadd.f32 0.0, %v583
        %585 = vdwg.mxu0
        %586 = vrot.lane.b32.xlu0 %v355, 80
        %v587 = vpop.permute.xlu0 %586
        %588 = vrot.lane.b32.xlu0 %v382, 32
        %v589 = vpop.permute.xlu0 %588
        %v590 = vsel %vm384, %v587, 0
        %v592 = vsel %vm384, %v589, 0
        %594 = vmatpush.xpose.msra.mxu0 0.0
        %595 = vmatpush.xpose.msra.mxu0 0.0
        %596 = vmatpush.xpose.msra.mxu0 0.0
        %597 = vmatpush.xpose.msra.mxu0 0.0
        %598 = vmatpush.xpose.msra.mxu0 0.0
        %599 = vmatpush.xpose.msra.mxu0 0.0
        %600 = vmatpush.xpose.msra.mxu0 0.0
        %601 = vmatpush.xpose.msra.mxu0 0.0
        %602 = vmatpush.xpose.msra.mxu0 0.0
        %603 = vmatpush.xpose.msra.mxu0 0.0
        %604 = vmatpush.xpose.msra.mxu0 0.0
        %605 = vmatpush.xpose.msra.mxu0 0.0
        %606 = vmatpush.xpose.msra.mxu0 0.0
        %607 = vmatpush.xpose.msra.mxu0 0.0
        %608 = vmatpush.xpose.msra.mxu0 0.0
        %609 = vmatpush.xpose.msra.mxu0 %v592
        %610 = vmatmul.f32.gmra.mxu0 %v590
        %v611 = vpop.f32.mrf.mxu0
        %v612 = vadd.f32 0.0, %v611
        %613 = vdwg.mxu0
        %v614 = vsel %vm414, -1e+30, %v612
        %v615 = vsel %vm416, %v614, -inf
        %616 = vmax.xlane.f32.xlu0 %v615
        %v617 = vpop.xlane.xlu0 %616
        %v618 = vsub.f32 %v614, %v617
        %v619 = vmul.f32 %v618, 1.442695
        %v620 = vpow.pop %v619
        %v621 = vsel %vm416, %v620, 0.0
        %622 = vadd.xlane.f32.xlu0 %v621
        %v623 = vpop.xlane.xlu0 %622
        %v624 = vrcp.pop %v623
        %v625 = vmul.f32 %v620, %v624
        %626 = vrot.lane.b32.xlu0 %v382, 16
        %v627 = vpop.permute.xlu0 %626
        %v630 = vsel %vm416, %v625, 0
        %632 = vmatpush.msra.mxu0 0.0
        %633 = vmatpush.msra.mxu0 0.0
        %634 = vmatpush.msra.mxu0 0.0
        %635 = vmatpush.msra.mxu0 0.0
        %636 = vmatpush.msra.mxu0 0.0
        %637 = vmatpush.msra.mxu0 0.0
        %638 = vmatpush.msra.mxu0 0.0
        %639 = vmatpush.msra.mxu0 0.0
        %640 = vmatpush.msra.mxu0 0.0
        %641 = vmatpush.msra.mxu0 0.0
        %642 = vmatpush.msra.mxu0 0.0
        %643 = vmatpush.msra.mxu0 0.0
        %644 = vmatpush.msra.mxu0 0.0
        %645 = vmatpush.msra.mxu0 0.0
        %646 = vmatpush.msra.mxu0 0.0
        %647 = vmatpush.msra.mxu0 %v627
        %648 = vmatmul.f32.gmra.mxu0 %v630
        %v649 = vpop.f32.mrf.mxu0
        %v650 = vadd.f32 0.0, %v649
        %651 = vdwg.mxu0
        %653 = vrot.lane.b32.xlu0 %v518, 16
        %v654 = vpop.permute.xlu0 %653
        %657 = vrot.lane.b32.xlu0 %v584, 32
        %v658 = vpop.permute.xlu0 %657
        %661 = vrot.lane.b32.xlu0 %v650, 48
        %v662 = vpop.permute.xlu0 %661
        %v664 = vsel %vm384, %v452, %v654
        %v665 = vsel %vm333, %v664, %v658
        %vm666 = vcmask 392192
        %v667 = vsel %vm666, %v665, %v662
        %v668 = vld [vmem:[%s5] sm:$0xff]
        %v669 = vld [vmem:[%s5 + $0x8] sm:$0xff]
        %v670 = vld [vmem:[%s5 + $0x10] sm:$0xff]
        %v671 = vld [vmem:[%s5 + $0x18] sm:$0xff]
        %v672 = vld [vmem:[%s5 + $0x20] sm:$0xff]
        %v673 = vld [vmem:[%s5 + $0x28] sm:$0xff]
        %v674 = vld [vmem:[%s5 + $0x30] sm:$0xff]
        %v675 = vld [vmem:[%s5 + $0x38] sm:$0xff]
        %v676 = vld [vmem:[%s6] sm:$0x1]
        %v678 = vperm.slane %v676, 0
        %vm680 = vcmask 523264
        %v682 = vsel %vm680, %v667, 0
        %684 = vmatpush.msra.mxu0 0.0
        %685 = vmatpush.msra.mxu0 0.0
        %686 = vmatpush.msra.mxu0 0.0
        %687 = vmatpush.msra.mxu0 0.0
        %688 = vmatpush.msra.mxu0 0.0
        %689 = vmatpush.msra.mxu0 0.0
        %690 = vmatpush.msra.mxu0 0.0
        %691 = vmatpush.msra.mxu0 0.0
        %692 = vmatpush.msra.mxu0 %v675
        %693 = vmatpush.msra.mxu0 %v674
        %694 = vmatpush.msra.mxu0 %v673
        %695 = vmatpush.msra.mxu0 %v672
        %696 = vmatpush.msra.mxu0 %v671
        %697 = vmatpush.msra.mxu0 %v670
        %698 = vmatpush.msra.mxu0 %v669
        %699 = vmatpush.msra.mxu0 %v668
        %700 = vmatmul.f32.gmra.mxu0 %v682
        %v701 = vpop.f32.mrf.mxu0
        %v702 = vadd.f32 %v678, %v701
        %703 = vdwg.mxu0
        %704 = vst.msk [vmem:[%s317] sm:$0xff] %vm333, %v702
        %s705 = sand.u32 %s194, 1
        %s706 = scalar_lea.sflag [#allocation4], %s705
        %s707 = sand.u32 %s194, 1
        %s708 = smul.addr %s707, 8
        %s709 = scalar_lea.vmem [#allocation5], %s708
        // Predicated region
        $region53: #{tpu_custom_call.1} parent=47 // pred_check
          %p710 = pneg %p204
        $region54: #{tpu_custom_call.1} parent=47 // pred_check_branch
          %712 = sbr.rel (%p710) target = $region56
        $region55: #{tpu_custom_call.1} parent=47 // pred_region
          %714 = vsyncadd %s706, 0
          %s715 = smul.addr %s24, 8
          %s716 = scalar_lea.hbm %s7, %s715
          %s718 = sshll.u32 %s709, 4
          %s719 = int_to_ptr.vmem [resolvable:$true] %s718
          %s720 = sshll.u32 %s716, 4
          %s721 = int_to_ptr.hbm [resolvable:$true] %s720
          %723 = dma.vmem_to_hbm [thread:$0]  %s719, 128, %s721, %s706
        $region56: #{tpu_custom_call.1} parent=47 // pred_fallthru
          _
      $region48: #{tpu_custom_call.1} parent=5 // pred_fallthru
        _
      %p724 = scmp.le.s32.totalorder 2, %s19
      // Predicated region
      $region57: #{tpu_custom_call.1} parent=5 // pred_check
        %p725 = pneg %p724
      $region58: #{tpu_custom_call.1} parent=5 // pred_check_branch
        %727 = sbr.rel (%p725) target = $region60
      $region59: #{tpu_custom_call.1} parent=5 // pred_region
        %s728 = ssub.s32 %s19, 2
        // Predicated region
        $region61: #{tpu_custom_call.1} parent=59 // pred_check
          %p729 = pneg %p210
        $region62: #{tpu_custom_call.1} parent=59 // pred_check_branch
          %731 = sbr.rel (%p729) target = $region64
        $region63: #{tpu_custom_call.1} parent=59 // pred_region
          %s732 = sand.u32 %s195, 1
          %s733 = scalar_lea.sflag [#allocation4], %s732
          %s734 = sand.u32 %s195, 1
          %s735 = smul.addr %s734, 8
          %s736 = scalar_lea.vmem [#allocation5], %s735
          %738 = dma.done %s733, 128
        $region64: #{tpu_custom_call.1} parent=59 // pred_fallthru
          _
      $region60: #{tpu_custom_call.1} parent=5 // pred_fallthru
        _
    $region6: #{tpu_custom_call.1} parent=1 // loop_footer
      %s23 = sadd.s32 1, %s19
    $region7: #{tpu_custom_call.1} parent=1 // loop_footer_branch
      %18 = sbr.rel target = $region3
    $region8: #{tpu_custom_call.1} parent=1 // loop_exit
      _
    %739 = vsyncpa [#allocation3], 1
    %s740 = scalar_lea.sflag [#allocation3], 1
    %741 = vsyncpa %s740, 1
    %742 = vsyncpa [#allocation4], 1
    %s743 = scalar_lea.sflag [#allocation4], 1
    %744 = vsyncpa %s743, 1

</llo_original>
